<compile_context>
chip_gen: v6e
topology: v6e:2x2x1
jax: 0.10.0
libtpu: 0.0.40
codegen_flags: <defaults>
</compile_context>

<pallas_src>
import functools

import jax
import jax.numpy as jnp
from jax.experimental import pallas as pl
from jax.experimental.pallas import tpu as pltpu

_LANE = 128
_ACC_ROWS = 256          # fixed accumulator height (256, 128) f32 = 128 KiB


def _chip_config():
    """(target_block_rows, num_shards) picked from the attached TPU."""
    try:
        kind = jax.devices()[0].device_kind.lower()
    except Exception:  # pragma: no cover - e.g. interpret mode
        kind = ""
    if "v6" in kind or "6e" in kind or "trillium" in kind:
        return 8192, 1            # 1 TC, 32 MiB scoped default is enough
    if "7" in kind:               # v7x: 2 TensorCores per chip
        return 8192, 2
    return 4096, 1                # v5e and unknown chips: conservative


def _dice_partial_kernel(p_ref, t_ref, out_ref, acc_prod, acc_sum, *,
                         block_rows, acc_rows, rows, steps_per_shard):
    c = pl.program_id(0)
    j = pl.program_id(1)

    @pl.when(j == 0)
    def _():
        acc_prod[...] = jnp.zeros_like(acc_prod)
        acc_sum[...] = jnp.zeros_like(acc_sum)

    logical_blk = c * steps_per_shard + j
    row0 = logical_blk * block_rows
    is_tail = row0 + block_rows > rows          # runtime scalar (free compare)

    def accumulate(p, t):
        prod = p * t
        ssum = p + t
        if block_rows != acc_rows:
            # Layout-preserving fold: split the sublane axis into (k, acc_rows)
            # and add the k slabs together (pure VALU, no cross-lane traffic).
            k = block_rows // acc_rows
            prod = jnp.sum(prod.reshape(k, acc_rows, _LANE), axis=0)
            ssum = jnp.sum(ssum.reshape(k, acc_rows, _LANE), axis=0)
        acc_prod[...] += prod
        acc_sum[...] += ssum

    # Fast path: full in-range block, no masking work at all.
    @pl.when(jnp.logical_not(is_tail))
    def _():
        accumulate(p_ref[...].astype(jnp.float32),
                   t_ref[...].astype(jnp.float32))

    # Slow path: ragged tail block (or a clamped duplicate block of the last
    # shard) - zero out rows past the logical end of the data.
    @pl.when(is_tail)
    def _():
        p = p_ref[...].astype(jnp.float32)
        t = t_ref[...].astype(jnp.float32)
        row_ids = row0 + jax.lax.broadcasted_iota(
            jnp.int32, (block_rows, _LANE), 0)
        valid = row_ids < rows
        accumulate(jnp.where(valid, p, 0.0), jnp.where(valid, t, 0.0))

    @pl.when(j == pl.num_programs(1) - 1)
    def _():
        out_ref[0, 0] = jnp.sum(acc_prod[...])   # partial intersection
        out_ref[0, 1] = jnp.sum(acc_sum[...])    # partial sum(p) + sum(t)


def dice_loss(y_pred, y_true, smooth=0.001, *, _block_rows=None, _num_shards=None):
    """Computes 1 - dice_score(y_pred, y_true, smooth) with a Pallas kernel."""
    assert y_pred.shape == y_true.shape
    n = y_pred.size
    p_flat = y_pred.reshape(-1)
    t_flat = y_true.reshape(-1)

    rows = n // _LANE
    rem = n - rows * _LANE

    if rows == 0:
        # Degenerate tiny input: plain JAX is cheaper than any kernel launch.
        p = p_flat.astype(jnp.float32)
        t = t_flat.astype(jnp.float32)
        inter = jnp.sum(p * t)
        total = jnp.sum(p) + jnp.sum(t)
        return 1.0 - (2.0 * inter + smooth) / (total + smooth)

    main = rows * _LANE
    # TODO(synk): when n % 128 != 0 the prefix slice below materializes a copy
    # of the whole array before the kernel (~3x HBM traffic); if unaligned
    # sizes matter, handle the <128-element tail in-kernel via pl.ANY + manual
    # DMA instead. For lane-aligned inputs (the common case) no copy occurs.
    p2 = (p_flat[:main] if rem else p_flat).reshape(rows, _LANE)
    t2 = (t_flat[:main] if rem else t_flat).reshape(rows, _LANE)

    target_rows, cfg_shards = _chip_config()
    if _block_rows is not None:
        target_rows = _block_rows
    if _num_shards is not None:
        cfg_shards = _num_shards

    # Full row extent for small inputs (single step, no mask); otherwise large
    # lane-dense blocks to amortize the ~0.35 us per-grid-step overhead.
    block_rows = rows if rows <= target_rows else target_rows
    n_blocks = pl.cdiv(rows, block_rows)
    num_shards = cfg_shards if n_blocks >= cfg_shards else 1
    spc = pl.cdiv(n_blocks, num_shards)          # grid steps per shard
    acc_rows = _ACC_ROWS if block_rows % _ACC_ROWS == 0 else block_rows

    if num_shards * spc == n_blocks:
        def in_idx(c, j):
            return (c * spc + j, 0)
    else:
        last_blk = n_blocks - 1

        def in_idx(c, j):
            # Clamp out-of-range logical blocks of the last shard; their
            # contribution is zeroed by the (runtime-gated) in-kernel mask.
            return (jnp.minimum(c * spc + j, last_blk), 0)

    kernel = functools.partial(
        _dice_partial_kernel, block_rows=block_rows, acc_rows=acc_rows,
        rows=rows, steps_per_shard=spc)

    partials = pl.pallas_call(
        kernel,
        out_shape=jax.ShapeDtypeStruct((num_shards, 2), jnp.float32),
        grid_spec=pltpu.PrefetchScalarGridSpec(
            num_scalar_prefetch=0,
            grid=(num_shards, spc),
            in_specs=[
                pl.BlockSpec((block_rows, _LANE), in_idx),
                pl.BlockSpec((block_rows, _LANE), in_idx),
            ],
            out_specs=pl.BlockSpec((1, 2), lambda c, j: (c, 0),
                                   memory_space=pltpu.SMEM),
            scratch_shapes=[
                pltpu.VMEM((acc_rows, _LANE), jnp.float32),
                pltpu.VMEM((acc_rows, _LANE), jnp.float32),
            ],
        ),
        compiler_params=pltpu.CompilerParams(
            dimension_semantics=("parallel", "arbitrary"),
            vmem_limit_bytes=32 * 1024 * 1024),
    )(p2, t2)

    inter = jnp.sum(partials[:, 0])
    total = jnp.sum(partials[:, 1])
    if rem:
        # Sub-lane remainder (< 128 elements): fold in with plain JAX.
        pr = p_flat[main:].astype(jnp.float32)
        tr = t_flat[main:].astype(jnp.float32)
        inter = inter + jnp.sum(pr * tr)
        total = total + jnp.sum(pr + tr)

    dice = (2.0 * inter + smooth) / (total + smooth)
    return 1.0 - dice


def _dice_loss_ref(y_pred, y_true, smooth=0.001):
    p = y_pred.astype(jnp.float32)
    t = y_true.astype(jnp.float32)
    inter = jnp.sum(p * t)
    dice = (2.0 * inter + smooth) / (jnp.sum(p) + jnp.sum(t) + smooth)
    return 1.0 - dice


if __name__ == "__main__":
    key = jax.random.PRNGKey(0)

    def make_inputs(k, shape):
        k1, k2 = jax.random.split(k)
        y_pred = jax.nn.sigmoid(jax.random.normal(k1, shape, dtype=jnp.float32))
        y_true = (jax.random.uniform(k2, shape) > 0.5).astype(jnp.float32)
        return y_pred, y_true

    dice_jit = jax.jit(dice_loss, static_argnames=("_block_rows", "_num_shards"))

    cases = [
        # NCHW like the PyTorch module; single full-extent block, fast path.
        ((2, 4, 16, 16), {}),
        # Forced small blocks: 2-way shard, ragged tail block + clamped dup.
        ((2, 8, 128, 130), dict(_block_rows=512, _num_shards=2)),
        # Forced small blocks: single shard with a partial tail block.
        ((2, 4, 400, 200), dict(_block_rows=1024, _num_shards=1)),
    ]
    keys = jax.random.split(key, len(cases))
    for k, (shape, kw) in zip(keys, cases):
        y_pred, y_true = make_inputs(k, shape)
        loss = jax.block_until_ready(dice_jit(y_pred, y_true, **kw))
        ref = jax.block_until_ready(_dice_loss_ref(y_pred, y_true))
        assert jnp.allclose(loss, ref, atol=1e-5, rtol=1e-4), (shape, loss, ref)

    print("KERNEL_OK")
</pallas_src>

<mosaic_0001>
module attributes {stable_mosaic.version = 11 : i64} {
  func.func @_dice_partial_kernel(%arg0: i32, %arg1: i32, %arg2: memref<16x128xf32, #tpu.memory_space<vmem>>, %arg3: memref<16x128xf32, #tpu.memory_space<vmem>>, %arg4: memref<1x2xf32, #tpu.memory_space<smem>>, %arg5: memref<16x128xf32, #tpu.memory_space<vmem>>, %arg6: memref<16x128xf32, #tpu.memory_space<vmem>>) attributes {dimension_semantics = [#tpu.dimension_semantics<parallel>, #tpu.dimension_semantics<arbitrary>], iteration_bounds = array<i64: 1, 1>, scalar_prefetch = 0 : i64, scratch_operands = 2 : i64, tpu.core_type = #tpu.core_type<tc>, window_params = [{transform_indices = @transform_0, window_bounds = array<i64: 16, 128>}, {transform_indices = @transform_1, window_bounds = array<i64: 16, 128>}, {transform_indices = @transform_2, window_bounds = array<i64: 1, 2>}]} {
    %c0_i32 = arith.constant 0 : i32
    %0 = arith.cmpi eq, %arg1, %c0_i32 : i32
    %1 = arith.extui %0 : i1 to i32
    %c0_i32_0 = arith.constant 0 : i32
    %2 = arith.cmpi ne, %1, %c0_i32_0 : i32
    scf.if %2 {
      %cst = arith.constant 0.000000e+00 : f32
      %16 = vector.broadcast %cst : f32 to vector<16x128xf32>
      %c0 = arith.constant 0 : index
      %c0_7 = arith.constant 0 : index
      %17 = vector.load %arg5[%c0, %c0_7] : memref<16x128xf32, #tpu.memory_space<vmem>>, vector<16x128xf32>
      tpu.vector_store %arg5[%c0, %c0_7], %16 {strides = array<i32>} : memref<16x128xf32, #tpu.memory_space<vmem>>, vector<16x128xf32>,
      %cst_8 = arith.constant 0.000000e+00 : f32
      %18 = vector.broadcast %cst_8 : f32 to vector<16x128xf32>
      %c0_9 = arith.constant 0 : index
      %c0_10 = arith.constant 0 : index
      %19 = vector.load %arg6[%c0_9, %c0_10] : memref<16x128xf32, #tpu.memory_space<vmem>>, vector<16x128xf32>
      tpu.vector_store %arg6[%c0_9, %c0_10], %18 {strides = array<i32>} : memref<16x128xf32, #tpu.memory_space<vmem>>, vector<16x128xf32>,
    } else {
    }
    %c1_i32 = arith.constant 1 : i32
    %3 = arith.muli %arg0, %c1_i32 : i32
    %4 = arith.addi %3, %arg1 : i32
    %c16_i32 = arith.constant 16 : i32
    %5 = arith.muli %4, %c16_i32 : i32
    %c16_i32_1 = arith.constant 16 : i32
    %6 = arith.addi %5, %c16_i32_1 : i32
    %c16_i32_2 = arith.constant 16 : i32
    %7 = arith.cmpi sgt, %6, %c16_i32_2 : i32
    %true = arith.constant true
    %8 = arith.xori %7, %true : i1
    %9 = arith.extui %8 : i1 to i32
    %c0_i32_3 = arith.constant 0 : i32
    %10 = arith.cmpi ne, %9, %c0_i32_3 : i32
    scf.if %10 {
      %c0 = arith.constant 0 : index
      %c0_7 = arith.constant 0 : index
      %16 = vector.load %arg2[%c0, %c0_7] : memref<16x128xf32, #tpu.memory_space<vmem>>, vector<16x128xf32>
      %c0_8 = arith.constant 0 : index
      %c0_9 = arith.constant 0 : index
      %17 = vector.load %arg3[%c0_8, %c0_9] : memref<16x128xf32, #tpu.memory_space<vmem>>, vector<16x128xf32>
      %18 = arith.mulf %16, %17 : vector<16x128xf32>
      %19 = arith.addf %16, %17 : vector<16x128xf32>
      %c0_10 = arith.constant 0 : index
      %c0_11 = arith.constant 0 : index
      %20 = vector.load %arg5[%c0_10, %c0_11] : memref<16x128xf32, #tpu.memory_space<vmem>>, vector<16x128xf32>
      %21 = arith.addf %20, %18 : vector<16x128xf32>
      %c0_12 = arith.constant 0 : index
      %c0_13 = arith.constant 0 : index
      %22 = vector.load %arg5[%c0_12, %c0_13] : memref<16x128xf32, #tpu.memory_space<vmem>>, vector<16x128xf32>
      tpu.vector_store %arg5[%c0_12, %c0_13], %21 {strides = array<i32>} : memref<16x128xf32, #tpu.memory_space<vmem>>, vector<16x128xf32>,
      %c0_14 = arith.constant 0 : index
      %c0_15 = arith.constant 0 : index
      %23 = vector.load %arg6[%c0_14, %c0_15] : memref<16x128xf32, #tpu.memory_space<vmem>>, vector<16x128xf32>
      %24 = arith.addf %23, %19 : vector<16x128xf32>
      %c0_16 = arith.constant 0 : index
      %c0_17 = arith.constant 0 : index
      %25 = vector.load %arg6[%c0_16, %c0_17] : memref<16x128xf32, #tpu.memory_space<vmem>>, vector<16x128xf32>
      tpu.vector_store %arg6[%c0_16, %c0_17], %24 {strides = array<i32>} : memref<16x128xf32, #tpu.memory_space<vmem>>, vector<16x128xf32>,
    } else {
    }
    %11 = arith.extui %7 : i1 to i32
    %c0_i32_4 = arith.constant 0 : i32
    %12 = arith.cmpi ne, %11, %c0_i32_4 : i32
    scf.if %12 {
      %c0 = arith.constant 0 : index
      %c0_7 = arith.constant 0 : index
      %16 = vector.load %arg2[%c0, %c0_7] : memref<16x128xf32, #tpu.memory_space<vmem>>, vector<16x128xf32>
      %c0_8 = arith.constant 0 : index
      %c0_9 = arith.constant 0 : index
      %17 = vector.load %arg3[%c0_8, %c0_9] : memref<16x128xf32, #tpu.memory_space<vmem>>, vector<16x128xf32>
      %18 = tpu.iota {dimensions = array<i32: 0>} : vector<16x128xi32>
      %19 = vector.broadcast %5 : i32 to vector<16x128xi32>
      %20 = arith.addi %19, %18 : vector<16x128xi32>
      %c16_i32_10 = arith.constant 16 : i32
      %21 = vector.broadcast %c16_i32_10 : i32 to vector<16x128xi32>
      %22 = arith.cmpi slt, %20, %21 : vector<16x128xi32>
      %cst = arith.constant 0.000000e+00 : f32
      %23 = vector.broadcast %cst : f32 to vector<16x128xf32>
      %24 = arith.select %22, %16, %23 : vector<16x128xi1>, vector<16x128xf32>
      %cst_11 = arith.constant 0.000000e+00 : f32
      %25 = vector.broadcast %cst_11 : f32 to vector<16x128xf32>
      %26 = arith.select %22, %17, %25 : vector<16x128xi1>, vector<16x128xf32>
      %27 = arith.mulf %24, %26 : vector<16x128xf32>
      %28 = arith.addf %24, %26 : vector<16x128xf32>
      %c0_12 = arith.constant 0 : index
      %c0_13 = arith.constant 0 : index
      %29 = vector.load %arg5[%c0_12, %c0_13] : memref<16x128xf32, #tpu.memory_space<vmem>>, vector<16x128xf32>
      %30 = arith.addf %29, %27 : vector<16x128xf32>
      %c0_14 = arith.constant 0 : index
      %c0_15 = arith.constant 0 : index
      %31 = vector.load %arg5[%c0_14, %c0_15] : memref<16x128xf32, #tpu.memory_space<vmem>>, vector<16x128xf32>
      tpu.vector_store %arg5[%c0_14, %c0_15], %30 {strides = array<i32>} : memref<16x128xf32, #tpu.memory_space<vmem>>, vector<16x128xf32>,
      %c0_16 = arith.constant 0 : index
      %c0_17 = arith.constant 0 : index
      %32 = vector.load %arg6[%c0_16, %c0_17] : memref<16x128xf32, #tpu.memory_space<vmem>>, vector<16x128xf32>
      %33 = arith.addf %32, %28 : vector<16x128xf32>
      %c0_18 = arith.constant 0 : index
      %c0_19 = arith.constant 0 : index
      %34 = vector.load %arg6[%c0_18, %c0_19] : memref<16x128xf32, #tpu.memory_space<vmem>>, vector<16x128xf32>
      tpu.vector_store %arg6[%c0_18, %c0_19], %33 {strides = array<i32>} : memref<16x128xf32, #tpu.memory_space<vmem>>, vector<16x128xf32>,
    } else {
    }
    %c0_i32_5 = arith.constant 0 : i32
    %13 = arith.cmpi eq, %arg1, %c0_i32_5 : i32
    %14 = arith.extui %13 : i1 to i32
    %c0_i32_6 = arith.constant 0 : i32
    %15 = arith.cmpi ne, %14, %c0_i32_6 : i32
    scf.if %15 {
      %c0 = arith.constant 0 : index
      %c0_7 = arith.constant 0 : index
      %16 = vector.load %arg5[%c0, %c0_7] : memref<16x128xf32, #tpu.memory_space<vmem>>, vector<16x128xf32>
      %17 = vector.shape_cast %16 : vector<16x128xf32> to vector<1x16x128xf32>
      %cst = arith.constant dense<0.000000e+00> : vector<1xf32>
      %18 = vector.multi_reduction <add>, %17, %cst [1, 2] : vector<1x16x128xf32> to vector<1xf32>
      %19 = vector.shape_cast %18 : vector<1xf32> to vector<1x1x1xf32>
      %20 = vector.extract %19[0, 0, 0] : f32 from vector<1x1x1xf32>
      %c0_8 = arith.constant 0 : index
      %c0_9 = arith.constant 0 : index
      %21 = memref.load %arg4[%c0_8, %c0_9] : memref<1x2xf32, #tpu.memory_space<smem>>
      memref.store %20, %arg4[%c0_8, %c0_9] : memref<1x2xf32, #tpu.memory_space<smem>>
      %c0_10 = arith.constant 0 : index
      %c0_11 = arith.constant 0 : index
      %22 = vector.load %arg6[%c0_10, %c0_11] : memref<16x128xf32, #tpu.memory_space<vmem>>, vector<16x128xf32>
      %23 = vector.shape_cast %22 : vector<16x128xf32> to vector<1x16x128xf32>
      %cst_12 = arith.constant dense<0.000000e+00> : vector<1xf32>
      %24 = vector.multi_reduction <add>, %23, %cst_12 [1, 2] : vector<1x16x128xf32> to vector<1xf32>
      %25 = vector.shape_cast %24 : vector<1xf32> to vector<1x1x1xf32>
      %26 = vector.extract %25[0, 0, 0] : f32 from vector<1x1x1xf32>
      %c0_13 = arith.constant 0 : index
      %c1 = arith.constant 1 : index
      %27 = memref.load %arg4[%c0_13, %c1] : memref<1x2xf32, #tpu.memory_space<smem>>
      memref.store %26, %arg4[%c0_13, %c1] : memref<1x2xf32, #tpu.memory_space<smem>>
    } else {
    }
    return
  }
  func.func @transform_0(%arg0: i32, %arg1: i32) -> (i32, i32) {
    %c1_i32 = arith.constant 1 : i32
    %0 = arith.muli %arg0, %c1_i32 : i32
    %1 = arith.addi %0, %arg1 : i32
    %c0_i32 = arith.constant 0 : i32
    %c0_i32_0 = arith.constant 0 : i32
    return %1, %c0_i32 : i32, i32
  }
  func.func @transform_1(%arg0: i32, %arg1: i32) -> (i32, i32) {
    %c1_i32 = arith.constant 1 : i32
    %0 = arith.muli %arg0, %c1_i32 : i32
    %1 = arith.addi %0, %arg1 : i32
    %c0_i32 = arith.constant 0 : i32
    %c0_i32_0 = arith.constant 0 : i32
    return %1, %c0_i32 : i32, i32
  }
  func.func @transform_2(%arg0: i32, %arg1: i32) -> (i32, i32) {
    %c0_i32 = arith.constant 0 : i32
    %c0_i32_0 = arith.constant 0 : i32
    return %arg0, %c0_i32 : i32, i32
  }
}

</mosaic_0001>

<llo_original>
// kernel: dice_loss.1
$region0: #{dice_loss.1}
  #allocation0 [shape = 'u32[]', space=smem, size = 0x4, offset = 0x4, fixed_abs, tag = 'smem constant byte address 0x4 - core index']
  #allocation1 [shape = 'u32[144,128]{1,0:T(1,128)}', space=vmem, size = 0x12000, scoped, tag = 'internal scratch']
  #allocation2 [shape = 'f32[16,128]{1,0:T(8,128)}', space=vmem, size = 0x2000, scoped, tag = 'scratch operand']
  #allocation3 [shape = 'f32[16,128]{1,0:T(8,128)}', space=vmem, size = 0x2000, scoped, tag = 'scratch operand']
  %s0 = inlined_call_operand.vmem [shape: f32[16,128], index: 0, kind: input, shape index: {}]
  %s1 = inlined_call_operand.vmem [shape: f32[16,128], index: 1, kind: input, shape index: {}]
  %s2 = inlined_call_operand.vmem [shape: f32[1,2], index: 2, kind: output, shape index: {}]
  %s3 = sld [smem:[#allocation0]]
  $region34: #{dice_loss.1} parent=0
    _
  %s5 = ssub.s32 1, %s3
  %s6 = scalar_select 0, %s5, %s3
  $region1: #{dice_loss.1} parent=0
    #allocation4 [shape = 'u8[512]{0}', space=smem, size = 0x200, scoped, tag = 'output window, operand 0, single buffered']
    #allocation5 [shape = 's32[1]{0}', space=sflag, size = 0x4, scoped, tag = 'scoped memory for dice_loss.1']
    %7 = vsyncpa [#allocation5], 0
    // Predicated region
    $region2: #{dice_loss.1} parent=1 // pred_check
      _
    $region3: #{dice_loss.1} parent=1 // pred_check_branch
      %9 = sbr.rel (0) target = $region5
    $region4: #{dice_loss.1} parent=1 // pred_region
      %s10 = sadd.s32 0, 0
      %s11 = smul.u32 2, %s10
      %p12 = scmp.lt.s32.totalorder %s11, 1
      %s13 = scalar_select %p12, %s11, 1
      %s14 = smul.addr %s13, 8
      %s15 = scalar_lea.vmem %s0, %s14
      %s16 = sadd.s32 0, 0
      %s17 = smul.u32 2, %s16
    $region5: #{dice_loss.1} parent=1 // pred_fallthru
      _
    // Predicated region
    $region6: #{dice_loss.1} parent=1 // pred_check
      _
    $region7: #{dice_loss.1} parent=1 // pred_check_branch
      %19 = sbr.rel (0) target = $region9
    $region8: #{dice_loss.1} parent=1 // pred_region
      %s20 = sadd.s32 0, 0
      %s21 = smul.u32 2, %s20
      %p22 = scmp.lt.s32.totalorder %s21, 1
      %s23 = scalar_select %p22, %s21, 1
      %s24 = smul.addr %s23, 8
      %s25 = scalar_lea.vmem %s1, %s24
      %s26 = sadd.s32 0, 0
      %s27 = smul.u32 2, %s26
    $region9: #{dice_loss.1} parent=1 // pred_fallthru
      _
    %s28 = sadd.s32 0, 0
    %s29 = smul.u32 2, %s28
    %p30 = scmp.lt.s32.totalorder %s29, 1
    %s31 = scalar_select %p30, %s29, 1
    %s32 = smul.addr %s31, 8
    %s33 = scalar_lea.vmem %s0, %s32
    %s34 = sadd.s32 0, 0
    %s35 = smul.u32 2, %s34
    %p36 = scmp.lt.s32.totalorder %s35, 1
    %s37 = scalar_select %p36, %s35, 1
    %s38 = smul.addr %s37, 8
    %s39 = scalar_lea.vmem %s1, %s38
    %s40 = sadd.s32 0, 0
    %s41 = smul.u32 2, %s40
    %p42 = scmp.lt.s32.totalorder %s41, 1
    %s43 = scalar_select %p42, %s41, 1
    %s44 = smul.addr %s43, 8
    %s45 = scalar_lea.vmem %s0, %s44
    %s46 = sadd.s32 0, 0
    %s47 = smul.u32 2, %s46
    %s48 = sadd.s32 0, 0
    %s49 = smul.u32 2, %s48
    %p50 = scmp.lt.s32.totalorder %s49, 1
    %s51 = scalar_select %p50, %s49, 1
    %s52 = smul.addr %s51, 8
    %s53 = scalar_lea.vmem %s1, %s52
    %s54 = sadd.s32 0, 0
    %s55 = smul.u32 2, %s54
    %p56 = scmp.eq.s32.totalorder 0, 0
    // Predicated region
    $region10: #{dice_loss.1} parent=1 // pred_check
      %p57 = pneg %p56
    $region11: #{dice_loss.1} parent=1 // pred_check_branch
      %59 = sbr.rel (%p57) target = $region13
    $region12: #{dice_loss.1} parent=1 // pred_region
      %60 = vst [vmem:[#allocation2] sm:$0xff] 0.0
      %61 = vst [vmem:[#allocation2 + $0x8] sm:$0xff] 0.0
      %62 = vst [vmem:[#allocation3] sm:$0xff] 0.0
      %63 = vst [vmem:[#allocation3 + $0x8] sm:$0xff] 0.0
    $region13: #{dice_loss.1} parent=1 // pred_fallthru
      _
    %s64 = sadd.s32 0, 0
    %s65 = smul.u32 %s64, 16
    %s66 = sadd.s32 %s65, 16
    %p67 = scmp.gt.s32.totalorder %s66, 16
    %p68 = scmp.le.s32.totalorder %s66, 16
    // Predicated region
    $region14: #{dice_loss.1} parent=1 // pred_check
      %p69 = pneg %p68
    $region15: #{dice_loss.1} parent=1 // pred_check_branch
      %71 = sbr.rel (%p69) target = $region17
    $region16: #{dice_loss.1} parent=1 // pred_region
      %v72 = vld [vmem:[%s45] sm:$0xff]
      %v73 = vld [vmem:[%s45 + $0x8] sm:$0xff]
      %v74 = vld [vmem:[%s53] sm:$0xff]
      %v75 = vld [vmem:[%s53 + $0x8] sm:$0xff]
      %v76 = vmul.f32 %v72, %v74
      %v77 = vmul.f32 %v73, %v75
      %v78 = vadd.f32 %v72, %v74
      %v79 = vadd.f32 %v73, %v75
      %v80 = vld [vmem:[#allocation2] sm:$0xff]
      %v81 = vld [vmem:[#allocation2 + $0x8] sm:$0xff]
      %v82 = vadd.f32 %v80, %v76
      %v83 = vadd.f32 %v81, %v77
      %84 = vst [vmem:[#allocation2] sm:$0xff] %v82
      %85 = vst [vmem:[#allocation2 + $0x8] sm:$0xff] %v83
      %v86 = vld [vmem:[#allocation3] sm:$0xff]
      %v87 = vld [vmem:[#allocation3 + $0x8] sm:$0xff]
      %v88 = vadd.f32 %v86, %v78
      %v89 = vadd.f32 %v87, %v79
      %90 = vst [vmem:[#allocation3] sm:$0xff] %v88
      %91 = vst [vmem:[#allocation3 + $0x8] sm:$0xff] %v89
    $region17: #{dice_loss.1} parent=1 // pred_fallthru
      _
    // Predicated region
    $region18: #{dice_loss.1} parent=1 // pred_check
      %p92 = pneg %p67
    $region19: #{dice_loss.1} parent=1 // pred_check_branch
      %94 = sbr.rel (%p92) target = $region21
    $region20: #{dice_loss.1} parent=1 // pred_region
      %v95 = vld [vmem:[%s45] sm:$0xff]
      %v96 = vld [vmem:[%s45 + $0x8] sm:$0xff]
      %v97 = vld [vmem:[%s53] sm:$0xff]
      %v98 = vld [vmem:[%s53 + $0x8] sm:$0xff]
      %v99 = vlaneseq
      %v100 = vshrl.u32 %v99, 7
      %v101 = vadd.s32 %v100, 8
      %v102 = vstv %s65
      %v103 = vadd.s32 %v102, %v100
      %v104 = vadd.s32 %v102, %v101
      %vm105 = vcmp.lt.s32.totalorder %v103, 16
      %vm106 = vcmp.lt.s32.totalorder %v104, 16
      %v107 = vsel %vm105, %v95, 0.0
      %v108 = vsel %vm106, %v96, 0.0
      %v109 = vsel %vm105, %v97, 0.0
      %v110 = vsel %vm106, %v98, 0.0
      %v111 = vmul.f32 %v107, %v109
      %v112 = vmul.f32 %v108, %v110
      %v113 = vadd.f32 %v107, %v109
      %v114 = vadd.f32 %v108, %v110
      %v115 = vld [vmem:[#allocation2] sm:$0xff]
      %v116 = vld [vmem:[#allocation2 + $0x8] sm:$0xff]
      %v117 = vadd.f32 %v115, %v111
      %v118 = vadd.f32 %v116, %v112
      %119 = vst [vmem:[#allocation2] sm:$0xff] %v117
      %120 = vst [vmem:[#allocation2 + $0x8] sm:$0xff] %v118
      %v121 = vld [vmem:[#allocation3] sm:$0xff]
      %v122 = vld [vmem:[#allocation3 + $0x8] sm:$0xff]
      %v123 = vadd.f32 %v121, %v113
      %v124 = vadd.f32 %v122, %v114
      %125 = vst [vmem:[#allocation3] sm:$0xff] %v123
      %126 = vst [vmem:[#allocation3 + $0x8] sm:$0xff] %v124
    $region21: #{dice_loss.1} parent=1 // pred_fallthru
      _
    // Predicated region
    $region22: #{dice_loss.1} parent=1 // pred_check
      %p127 = pneg %p56
    $region23: #{dice_loss.1} parent=1 // pred_check_branch
      %129 = sbr.rel (%p127) target = $region25
    $region24: #{dice_loss.1} parent=1 // pred_region
      %v130 = vld [vmem:[#allocation2] sm:$0xff]
      %v131 = vld [vmem:[#allocation2 + $0x8] sm:$0xff]
      %v132 = vadd.f32 %v130, %v131
      %133 = vadd.xlane.f32.xlu0 %v132
      %v134 = vpop.xlane.xlu0 %133
      %v135 = vrot.slane %v134, 4
      %v136 = vadd.f32 %v134, %v135
      %v137 = vrot.slane %v136, 2
      %v138 = vadd.f32 %v136, %v137
      %v139 = vrot.slane %v138, 1
      %v140 = vadd.f32 %v138, %v139
      %s141 = vtos %v140
      %s142 = scalar_lea.smem [#allocation4], 0
      %143 = sst [smem:[%s142]] %s141
      %v144 = vld [vmem:[#allocation3] sm:$0xff]
      %v145 = vld [vmem:[#allocation3 + $0x8] sm:$0xff]
      %v146 = vadd.f32 %v144, %v145
      %147 = vadd.xlane.f32.xlu0 %v146
      %v148 = vpop.xlane.xlu0 %147
      %v149 = vrot.slane %v148, 4
      %v150 = vadd.f32 %v148, %v149
      %v151 = vrot.slane %v150, 2
      %v152 = vadd.f32 %v150, %v151
      %v153 = vrot.slane %v152, 1
      %v154 = vadd.f32 %v152, %v153
      %s155 = vtos %v154
      %s156 = scalar_lea.smem [#allocation4], 1
      %157 = sst [smem:[%s156]] %s155
    $region25: #{dice_loss.1} parent=1 // pred_fallthru
      _
    // Predicated region
    $region26: #{dice_loss.1} parent=1 // pred_check
      _
    $region27: #{dice_loss.1} parent=1 // pred_check_branch
      %159 = sbr.rel (0) target = $region29
    $region28: #{dice_loss.1} parent=1 // pred_region
      %s161 = ssub.s32 16, 16
      %162 = vsyncadd [#allocation5], %s161
      %s164 = sshll.u32 %s2, 4
      %s165 = int_to_ptr.vmem [resolvable:$true] %s164
      %167 = dma.smem_to_vmem [#allocation4], 16, %s165, [#allocation5]
    $region29: #{dice_loss.1} parent=1 // pred_fallthru
      _
    // Predicated region
    $region30: #{dice_loss.1} parent=1 // pred_check
      _
    $region31: #{dice_loss.1} parent=1 // pred_check_branch
      %169 = sbr.rel (0) target = $region33
    $region32: #{dice_loss.1} parent=1 // pred_region
      %170 = dma.done [#allocation5], 16
    $region33: #{dice_loss.1} parent=1 // pred_fallthru
      _
    %171 = sfence
    %172 = vsyncpa [#allocation5], 1

</llo_original>
